<compile_context>
chip_gen: v7x
topology: tpu7x:2x2x1
jax: 0.10.0
libtpu: 0.0.40
codegen_flags: <defaults>
</compile_context>

<pallas_src>
import jax
import jax.numpy as jnp
from jax.experimental import pallas as pl
from jax.experimental.pallas import tpu as pltpu

# Below this total output size, jnp.concatenate (fused by XLA) beats the fixed
# pallas_call + DMA-descriptor-issue overhead.
_SMALL_BYTES_THRESHOLD = 1 << 20  # 1 MiB
# Maximum number of DMA semaphores / in-flight copies.
_DMA_SEM_POOL = 8


def _make_concat_kernel(row_sizes):
    """Builds a kernel closure for a fixed, static list of per-param row counts.

    Kernel signature: kernel(*in_hbm_refs, out_hbm_ref, dma_sems)
    """
    n_params = len(row_sizes)
    offsets = []
    off = 0
    for r in row_sizes:
        offsets.append(off)
        off += r

    n_active = sum(1 for r in row_sizes if r > 0)
    n_sems = min(max(1, n_active), _DMA_SEM_POOL)

    def kernel(*refs):
        in_refs = refs[:n_params]
        out_ref = refs[n_params]
        sem = refs[n_params + 1]

        in_flight = []  # copy descriptors, in issue order
        issued = 0
        for i in range(n_params):
            if row_sizes[i] == 0:
                # Zero-row param: nothing to copy, skip statically.
                continue
            slot = issued % n_sems
            # Rotating semaphore pool: before reusing a slot, retire the copy
            # that previously used it.  Up to n_sems copies stay in flight.
            if issued >= n_sems:
                in_flight[issued - n_sems].wait()
            cp = pltpu.make_async_copy(
                in_refs[i],
                out_ref.at[pl.ds(offsets[i], row_sizes[i])],
                sem.at[slot],
            )
            cp.start()
            in_flight.append(cp)
            issued += 1

        # Retire the remaining in-flight copies.
        for cp in in_flight[max(0, issued - n_sems):]:
            cp.wait()

    return kernel, n_sems


def concat_params(params, *, force_pallas=False):
    """Pallas equivalent of Model.forward(): torch.cat(params, dim=0)."""
    params = list(params)
    assert len(params) >= 1
    tail = tuple(params[0].shape[1:])
    dtype = params[0].dtype
    for p in params:
        assert tuple(p.shape[1:]) == tail and p.dtype == dtype

    row_sizes = [p.shape[0] for p in params]
    total_rows = sum(row_sizes)
    out_shape = jax.ShapeDtypeStruct((total_rows,) + tail, dtype)

    tail_elems = 1
    for d in tail:
        tail_elems *= d
    total_bytes = total_rows * tail_elems * jnp.dtype(dtype).itemsize

    # Small-size dispatch: skip the custom kernel, let XLA fuse/fold the concat.
    if not force_pallas and total_bytes <= _SMALL_BYTES_THRESHOLD:
        return jnp.concatenate(params, axis=0)

    kernel, n_sems = _make_concat_kernel(row_sizes)

    return pl.pallas_call(
        kernel,
        out_shape=out_shape,
        # Raw HBM refs: no auto-DMA / no VMEM staging; kernel drives the DMAs.
        in_specs=[pl.BlockSpec(memory_space=pl.ANY) for _ in params],
        out_specs=pl.BlockSpec(memory_space=pl.ANY),
        scratch_shapes=[pltpu.SemaphoreType.DMA((n_sems,))],
        compiler_params=pltpu.CompilerParams(has_side_effects=True),
    )(*params)


if __name__ == "__main__":
    # Deterministic "parameters" (the module's __init__ just registers whatever
    # tensors it is given).  Small shapes; the kernel itself imposes no row
    # alignment requirement (each param is a contiguous slab of the output).
    key = jax.random.PRNGKey(0)
    k0, k1, k2, k3 = jax.random.split(key, 4)
    params = [
        jax.random.normal(k0, (8, 128), dtype=jnp.float32),
        jax.random.normal(k1, (16, 128), dtype=jnp.float32),
        jax.random.normal(k2, (24, 128), dtype=jnp.float32),
        jax.random.normal(k3, (40, 128), dtype=jnp.float32),
    ]
    ref = jnp.concatenate(params, axis=0)

    # 1) Force the Pallas DMA-concat kernel (the path used for large params).
    out_pallas = jax.block_until_ready(concat_params(params, force_pallas=True))
    assert out_pallas.shape == ref.shape
    assert jnp.array_equal(out_pallas, ref)

    # 2) Default dispatch: this total size is small, so it takes the
    #    jnp.concatenate fast path (same semantics, lower overhead).
    out_dispatch = jax.block_until_ready(concat_params(params))
    assert jnp.array_equal(out_dispatch, ref)

    print("KERNEL_OK")
</pallas_src>

<mosaic_0001>
module attributes {stable_mosaic.version = 11 : i64} {
  func.func @kernel(%arg0: memref<8x128xf32, #tpu.memory_space<any>>, %arg1: memref<16x128xf32, #tpu.memory_space<any>>, %arg2: memref<24x128xf32, #tpu.memory_space<any>>, %arg3: memref<40x128xf32, #tpu.memory_space<any>>, %arg4: memref<88x128xf32, #tpu.memory_space<any>>, %arg5: memref<4x!tpu.dma_semaphore, #tpu.memory_space<semaphore_mem>>) attributes {dimension_semantics = [], scalar_prefetch = 0 : i64, scratch_operands = 1 : i64, tpu.core_type = #tpu.core_type<tc>} {
    %c0_i32 = arith.constant 0 : i32
    %c0_i32_0 = arith.constant 0 : i32
    %c0_i32_1 = arith.constant 0 : i32
    %0 = tpu.memref_slice %arg4[%c0_i32_0, %c0_i32_1] : memref<88x128xf32, #tpu.memory_space<any>> -> memref<8x128xf32, #tpu.memory_space<any>>
    %1 = tpu.memref_slice %arg5[%c0_i32] : memref<4x!tpu.dma_semaphore, #tpu.memory_space<semaphore_mem>> -> memref<1x!tpu.dma_semaphore, #tpu.memory_space<semaphore_mem>>
    %2 = tpu.memref_squeeze %1 : memref<1x!tpu.dma_semaphore, #tpu.memory_space<semaphore_mem>> -> memref<!tpu.dma_semaphore, #tpu.memory_space<semaphore_mem>>
    tpu.enqueue_dma source(%arg0 : memref<8x128xf32, #tpu.memory_space<any>>) target(%0 : memref<8x128xf32, #tpu.memory_space<any>>) target_semaphore(%2 : memref<!tpu.dma_semaphore, #tpu.memory_space<semaphore_mem>>)
    %c1_i32 = arith.constant 1 : i32
    %c8_i32 = arith.constant 8 : i32
    %c0_i32_2 = arith.constant 0 : i32
    %3 = tpu.memref_slice %arg4[%c8_i32, %c0_i32_2] : memref<88x128xf32, #tpu.memory_space<any>> -> memref<16x128xf32, #tpu.memory_space<any>>
    %4 = tpu.memref_slice %arg5[%c1_i32] : memref<4x!tpu.dma_semaphore, #tpu.memory_space<semaphore_mem>> -> memref<1x!tpu.dma_semaphore, #tpu.memory_space<semaphore_mem>>
    %5 = tpu.memref_squeeze %4 : memref<1x!tpu.dma_semaphore, #tpu.memory_space<semaphore_mem>> -> memref<!tpu.dma_semaphore, #tpu.memory_space<semaphore_mem>>
    tpu.enqueue_dma source(%arg1 : memref<16x128xf32, #tpu.memory_space<any>>) target(%3 : memref<16x128xf32, #tpu.memory_space<any>>) target_semaphore(%5 : memref<!tpu.dma_semaphore, #tpu.memory_space<semaphore_mem>>)
    %c2_i32 = arith.constant 2 : i32
    %c24_i32 = arith.constant 24 : i32
    %c0_i32_3 = arith.constant 0 : i32
    %6 = tpu.memref_slice %arg4[%c24_i32, %c0_i32_3] : memref<88x128xf32, #tpu.memory_space<any>> -> memref<24x128xf32, #tpu.memory_space<any>>
    %7 = tpu.memref_slice %arg5[%c2_i32] : memref<4x!tpu.dma_semaphore, #tpu.memory_space<semaphore_mem>> -> memref<1x!tpu.dma_semaphore, #tpu.memory_space<semaphore_mem>>
    %8 = tpu.memref_squeeze %7 : memref<1x!tpu.dma_semaphore, #tpu.memory_space<semaphore_mem>> -> memref<!tpu.dma_semaphore, #tpu.memory_space<semaphore_mem>>
    tpu.enqueue_dma source(%arg2 : memref<24x128xf32, #tpu.memory_space<any>>) target(%6 : memref<24x128xf32, #tpu.memory_space<any>>) target_semaphore(%8 : memref<!tpu.dma_semaphore, #tpu.memory_space<semaphore_mem>>)
    %c3_i32 = arith.constant 3 : i32
    %c48_i32 = arith.constant 48 : i32
    %c0_i32_4 = arith.constant 0 : i32
    %9 = tpu.memref_slice %arg4[%c48_i32, %c0_i32_4] : memref<88x128xf32, #tpu.memory_space<any>> -> memref<40x128xf32, #tpu.memory_space<any>>
    %10 = tpu.memref_slice %arg5[%c3_i32] : memref<4x!tpu.dma_semaphore, #tpu.memory_space<semaphore_mem>> -> memref<1x!tpu.dma_semaphore, #tpu.memory_space<semaphore_mem>>
    %11 = tpu.memref_squeeze %10 : memref<1x!tpu.dma_semaphore, #tpu.memory_space<semaphore_mem>> -> memref<!tpu.dma_semaphore, #tpu.memory_space<semaphore_mem>>
    tpu.enqueue_dma source(%arg3 : memref<40x128xf32, #tpu.memory_space<any>>) target(%9 : memref<40x128xf32, #tpu.memory_space<any>>) target_semaphore(%11 : memref<!tpu.dma_semaphore, #tpu.memory_space<semaphore_mem>>)
    %c0_i32_5 = arith.constant 0 : i32
    %c0_i32_6 = arith.constant 0 : i32
    %c0_i32_7 = arith.constant 0 : i32
    %12 = tpu.memref_slice %arg4[%c0_i32_6, %c0_i32_7] : memref<88x128xf32, #tpu.memory_space<any>> -> memref<8x128xf32, #tpu.memory_space<any>>
    %13 = tpu.memref_slice %arg5[%c0_i32_5] : memref<4x!tpu.dma_semaphore, #tpu.memory_space<semaphore_mem>> -> memref<1x!tpu.dma_semaphore, #tpu.memory_space<semaphore_mem>>
    %14 = tpu.memref_squeeze %13 : memref<1x!tpu.dma_semaphore, #tpu.memory_space<semaphore_mem>> -> memref<!tpu.dma_semaphore, #tpu.memory_space<semaphore_mem>>
    tpu.wait_dma2 semaphore(%14 : memref<!tpu.dma_semaphore, #tpu.memory_space<semaphore_mem>>) src(%arg0 : memref<8x128xf32, #tpu.memory_space<any>>) dst(%12 : memref<8x128xf32, #tpu.memory_space<any>>)
    %c1_i32_8 = arith.constant 1 : i32
    %c8_i32_9 = arith.constant 8 : i32
    %c0_i32_10 = arith.constant 0 : i32
    %15 = tpu.memref_slice %arg4[%c8_i32_9, %c0_i32_10] : memref<88x128xf32, #tpu.memory_space<any>> -> memref<16x128xf32, #tpu.memory_space<any>>
    %16 = tpu.memref_slice %arg5[%c1_i32_8] : memref<4x!tpu.dma_semaphore, #tpu.memory_space<semaphore_mem>> -> memref<1x!tpu.dma_semaphore, #tpu.memory_space<semaphore_mem>>
    %17 = tpu.memref_squeeze %16 : memref<1x!tpu.dma_semaphore, #tpu.memory_space<semaphore_mem>> -> memref<!tpu.dma_semaphore, #tpu.memory_space<semaphore_mem>>
    tpu.wait_dma2 semaphore(%17 : memref<!tpu.dma_semaphore, #tpu.memory_space<semaphore_mem>>) src(%arg1 : memref<16x128xf32, #tpu.memory_space<any>>) dst(%15 : memref<16x128xf32, #tpu.memory_space<any>>)
    %c2_i32_11 = arith.constant 2 : i32
    %c24_i32_12 = arith.constant 24 : i32
    %c0_i32_13 = arith.constant 0 : i32
    %18 = tpu.memref_slice %arg4[%c24_i32_12, %c0_i32_13] : memref<88x128xf32, #tpu.memory_space<any>> -> memref<24x128xf32, #tpu.memory_space<any>>
    %19 = tpu.memref_slice %arg5[%c2_i32_11] : memref<4x!tpu.dma_semaphore, #tpu.memory_space<semaphore_mem>> -> memref<1x!tpu.dma_semaphore, #tpu.memory_space<semaphore_mem>>
    %20 = tpu.memref_squeeze %19 : memref<1x!tpu.dma_semaphore, #tpu.memory_space<semaphore_mem>> -> memref<!tpu.dma_semaphore, #tpu.memory_space<semaphore_mem>>
    tpu.wait_dma2 semaphore(%20 : memref<!tpu.dma_semaphore, #tpu.memory_space<semaphore_mem>>) src(%arg2 : memref<24x128xf32, #tpu.memory_space<any>>) dst(%18 : memref<24x128xf32, #tpu.memory_space<any>>)
    %c3_i32_14 = arith.constant 3 : i32
    %c48_i32_15 = arith.constant 48 : i32
    %c0_i32_16 = arith.constant 0 : i32
    %21 = tpu.memref_slice %arg4[%c48_i32_15, %c0_i32_16] : memref<88x128xf32, #tpu.memory_space<any>> -> memref<40x128xf32, #tpu.memory_space<any>>
    %22 = tpu.memref_slice %arg5[%c3_i32_14] : memref<4x!tpu.dma_semaphore, #tpu.memory_space<semaphore_mem>> -> memref<1x!tpu.dma_semaphore, #tpu.memory_space<semaphore_mem>>
    %23 = tpu.memref_squeeze %22 : memref<1x!tpu.dma_semaphore, #tpu.memory_space<semaphore_mem>> -> memref<!tpu.dma_semaphore, #tpu.memory_space<semaphore_mem>>
    tpu.wait_dma2 semaphore(%23 : memref<!tpu.dma_semaphore, #tpu.memory_space<semaphore_mem>>) src(%arg3 : memref<40x128xf32, #tpu.memory_space<any>>) dst(%21 : memref<40x128xf32, #tpu.memory_space<any>>)
    return
  }
}

</mosaic_0001>

<llo_original>
// kernel: tpu_custom_call.1
$region0: #{tpu_custom_call.1}
  #allocation0 [shape = 'u32[]', space=smem, size = 0x4, offset = 0x4, fixed_abs, tag = 'smem constant byte address 0x4 - core index']
  #allocation1 [shape = 'u32[144,128]{1,0:T(1,128)}', space=vmem, size = 0x12000, scoped, tag = 'internal scratch']
  #allocation2 [shape = 's32[4]{0}', space=sflag, size = 0x10, scoped, tag = 'scratch operand']
  #allocation3 [shape = 's32[]', space=sflag, size = 0x4, offset = 0, fixed_abs, tag = 'sflag constant byte address 0x0 - dummy sync flag']
  #allocation4 [shape = 'u32[0]{0}', space=smem, size = 0, offset = 0, fixed_abs, tag = 'smem constant byte address 0x0 - null']
  #allocation5 [shape = 's32[]', space=sflag, size = 0x4, offset = 0, fixed_abs, tag = 'sflag constant byte address 0x0 - dummy sync flag']
  #allocation6 [shape = 'u32[0]{0}', space=smem, size = 0, offset = 0, fixed_abs, tag = 'smem constant byte address 0x0 - null']
  #allocation7 [shape = 's32[]', space=sflag, size = 0x4, offset = 0, fixed_abs, tag = 'sflag constant byte address 0x0 - dummy sync flag']
  #allocation8 [shape = 'u32[0]{0}', space=smem, size = 0, offset = 0, fixed_abs, tag = 'smem constant byte address 0x0 - null']
  #allocation9 [shape = 's32[]', space=sflag, size = 0x4, offset = 0, fixed_abs, tag = 'sflag constant byte address 0x0 - dummy sync flag']
  #allocation10 [shape = 'u32[0]{0}', space=smem, size = 0, offset = 0, fixed_abs, tag = 'smem constant byte address 0x0 - null']
  %s0 = inlined_call_operand.hbm [shape: f32[8,128], index: 0, kind: input, shape index: {}]
  %s1 = inlined_call_operand.hbm [shape: f32[16,128], index: 1, kind: input, shape index: {}]
  %s2 = inlined_call_operand.hbm [shape: f32[24,128], index: 2, kind: input, shape index: {}]
  %s3 = inlined_call_operand.hbm [shape: f32[40,128], index: 3, kind: input, shape index: {}]
  %s4 = inlined_call_operand.hbm [shape: f32[88,128], index: 4, kind: output, shape index: {}]
  %s5 = sld [smem:[#allocation0]]
  $region2: #{tpu_custom_call.1} parent=0
    _
  %s7 = ssub.s32 1, %s5
  %s8 = scalar_select 0, %s7, %s5
  %s10 = sshll.u32 1, 14
  %s11 = sxor.u32 4294967295, %s10
  %s14 = sshll.u32 3, 24
  %s15 = sxor.u32 4294967295, %s14
  %s16 = sand.u32 0, %s15
  %s18 = sor.u32 %s16, 0
  %21 = dma.general %s0, 128, %s4, [#allocation2], [#allocation3], [#allocation4], %s18, 0
  %s22 = scalar_lea.hbm %s4, 128
  %s23 = scalar_lea.sflag [#allocation2], 1
  %s25 = sshll.u32 1, 14
  %s26 = sxor.u32 4294967295, %s25
  %s29 = sshll.u32 3, 24
  %s30 = sxor.u32 4294967295, %s29
  %s31 = sand.u32 0, %s30
  %s33 = sor.u32 %s31, 0
  %36 = dma.general %s1, 256, %s22, %s23, [#allocation5], [#allocation6], %s33, 0
  %s37 = scalar_lea.hbm %s4, 384
  %s38 = scalar_lea.sflag [#allocation2], 2
  %s40 = sshll.u32 1, 14
  %s41 = sxor.u32 4294967295, %s40
  %s44 = sshll.u32 3, 24
  %s45 = sxor.u32 4294967295, %s44
  %s46 = sand.u32 0, %s45
  %s48 = sor.u32 %s46, 0
  %51 = dma.general %s2, 384, %s37, %s38, [#allocation7], [#allocation8], %s48, 0
  %s52 = scalar_lea.hbm %s4, 768
  %s53 = scalar_lea.sflag [#allocation2], 3
  %s55 = sshll.u32 1, 14
  %s56 = sxor.u32 4294967295, %s55
  %s59 = sshll.u32 3, 24
  %s60 = sxor.u32 4294967295, %s59
  %s61 = sand.u32 0, %s60
  %s63 = sor.u32 %s61, 0
  %66 = dma.general %s3, 640, %s52, %s53, [#allocation9], [#allocation10], %s63, 0
  %s67 = smul.u32 8, 1
  %s68 = sshll.u32 %s67, 4
  %69 = dma.done [#allocation2], %s68
  %s70 = smul.u32 16, 1
  %s71 = sshll.u32 %s70, 4
  %72 = dma.done %s23, %s71
  %s73 = smul.u32 24, 1
  %s74 = sshll.u32 %s73, 4
  %75 = dma.done %s38, %s74
  %s76 = smul.u32 40, 1
  %s77 = sshll.u32 %s76, 4
  %78 = dma.done %s53, %s77
  %79 = vsyncmov [#allocation2]
  %s80 = vpop.sfrf %79
  %p81 = scmp.eq.s32.totalorder %s80, 0
  %p82 = pneg %p81
  %84 = shalt.err (%p82)
  %s85 = scalar_lea.sflag [#allocation2], 1
  %86 = vsyncmov %s85
  %s87 = vpop.sfrf %86
  %p88 = scmp.eq.s32.totalorder %s87, 0
  %p89 = pneg %p88
  %91 = shalt.err (%p89)
  %s92 = scalar_lea.sflag [#allocation2], 2
  %93 = vsyncmov %s92
  %s94 = vpop.sfrf %93
  %p95 = scmp.eq.s32.totalorder %s94, 0
  %p96 = pneg %p95
  %98 = shalt.err (%p96)
  %s99 = scalar_lea.sflag [#allocation2], 3
  %100 = vsyncmov %s99
  %s101 = vpop.sfrf %100
  %p102 = scmp.eq.s32.totalorder %s101, 0
  %p103 = pneg %p102
  %105 = shalt.err (%p103)

</llo_original>
